<compile_context>
chip_gen: v7x
topology: tpu7x:2x2x1
jax: 0.10.0
libtpu: 0.0.40
codegen_flags: <defaults>
</compile_context>

<pallas_src>
import functools

import jax
import jax.numpy as jnp
from jax.experimental import pallas as pl
from jax.experimental.pallas import tpu as pltpu


def _crop_kernel(x_ref, o_ref, *, L_out):
    # x_ref: (TR, W) with W >= L_out; o_ref: (TR, L_out).
    # Static contiguous slice -> plain vld/vst, no strided / gather access.
    o_ref[...] = x_ref[:, :L_out]


def _pick_row_tile(R, row_bytes):
    """Row-tile the (R, W) slab only if it doesn't comfortably fit in VMEM."""
    budget = 1 << 20  # ~1 MiB per input block (x2 double buffer + output) — safe v5e..v7x
    if R * row_bytes <= budget:
        return R                      # single block, single grid step (fewest launches)
    if R % 8 != 0:
        return R                      # full-dim block is always legal
    for cand in (2048, 1024, 512, 256, 128, 64, 32, 16, 8):
        if R % cand == 0 and cand * row_bytes <= budget:
            return cand
    return 8


def cropping1d(x, crop_right):
    """x: (B, C, L) in the PyTorch NCL convention. Returns x[:, :, :L - crop_right]."""
    if crop_right <= 0:
        return x                      # PyTorch semantics: identity when crop_right == 0
    B, C, L = x.shape
    L_out = L - crop_right
    assert L_out > 0, "crop_right must be smaller than the input length"

    R = B * C
    x2 = x.reshape(R, L)              # free reshape: fold batch+channels into sublanes

    # Lane-aligned read width: never DMA the cropped tail beyond the next 128-lane
    # boundary (when L_out is a multiple of 128, nothing extra is read at all).
    W = min(L, ((L_out + 127) // 128) * 128)
    TR = _pick_row_tile(R, W * x.dtype.itemsize)

    out2d = pl.pallas_call(
        functools.partial(_crop_kernel, L_out=L_out),
        out_shape=jax.ShapeDtypeStruct((R, L_out), x.dtype),
        grid=(R // TR,),
        in_specs=[pl.BlockSpec((TR, W), lambda i: (i, 0))],
        out_specs=pl.BlockSpec((TR, L_out), lambda i: (i, 0)),
        compiler_params=pltpu.CompilerParams(
            dimension_semantics=("parallel",)),   # v7x: split row tiles across 2 TCs
    )(x2)
    return out2d.reshape(B, C, L_out)


if __name__ == "__main__":
    key = jax.random.PRNGKey(0)
    k1, k2 = jax.random.split(key)

    # Case 1: lane-dense output (L_out is a multiple of 128).
    B, C, L, crop = 2, 8, 160, 32
    x = jax.random.normal(k1, (B, C, L), dtype=jnp.float32)
    fwd = jax.jit(functools.partial(cropping1d, crop_right=crop))
    out = jax.block_until_ready(fwd(x))
    assert out.shape == (B, C, L - crop), out.shape
    assert bool(jnp.all(out == x[:, :, :-crop]))

    # Case 2: odd, non-lane-aligned sizes also work.
    x_odd = jax.random.normal(k2, (2, 4, 50), dtype=jnp.float32)
    out_odd = jax.block_until_ready(
        jax.jit(functools.partial(cropping1d, crop_right=7))(x_odd))
    assert out_odd.shape == (2, 4, 43), out_odd.shape
    assert bool(jnp.all(out_odd == x_odd[:, :, :-7]))

    # Case 3: crop_right == 0 is the identity (PyTorch semantics).
    out_id = cropping1d(x_odd, 0)
    assert out_id.shape == x_odd.shape
    assert bool(jnp.all(out_id == x_odd))

    print("KERNEL_OK")
</pallas_src>

<mosaic_0001>
module attributes {stable_mosaic.version = 11 : i64} {
  func.func @_crop_kernel(%arg0: i32, %arg1: memref<16x128xf32, #tpu.memory_space<vmem>>, %arg2: memref<16x128xf32, #tpu.memory_space<vmem>>) attributes {dimension_semantics = [#tpu.dimension_semantics<parallel>], iteration_bounds = array<i64: 1>, scalar_prefetch = 0 : i64, scratch_operands = 0 : i64, tpu.core_type = #tpu.core_type<tc>, window_params = [{transform_indices = @transform_0, window_bounds = array<i64: 16, 128>}, {transform_indices = @transform_1, window_bounds = array<i64: 16, 128>}]} {
    %c0 = arith.constant 0 : index
    %c0_0 = arith.constant 0 : index
    %0 = vector.load %arg1[%c0, %c0_0] : memref<16x128xf32, #tpu.memory_space<vmem>>, vector<16x128xf32>
    %c0_1 = arith.constant 0 : index
    %c0_2 = arith.constant 0 : index
    %1 = vector.load %arg2[%c0_1, %c0_2] : memref<16x128xf32, #tpu.memory_space<vmem>>, vector<16x128xf32>
    tpu.vector_store %arg2[%c0_1, %c0_2], %0 {strides = array<i32>} : memref<16x128xf32, #tpu.memory_space<vmem>>, vector<16x128xf32>,
    return
  }
  func.func @transform_0(%arg0: i32) -> (i32, i32) {
    %c0_i32 = arith.constant 0 : i32
    %c0_i32_0 = arith.constant 0 : i32
    return %arg0, %c0_i32 : i32, i32
  }
  func.func @transform_1(%arg0: i32) -> (i32, i32) {
    %c0_i32 = arith.constant 0 : i32
    %c0_i32_0 = arith.constant 0 : i32
    return %arg0, %c0_i32 : i32, i32
  }
}

</mosaic_0001>

<llo_original>
// kernel: cropping1d.1
$region0: #{cropping1d.1}
  #allocation0 [shape = 'u32[]', space=smem, size = 0x4, offset = 0x4, fixed_abs, tag = 'smem constant byte address 0x4 - core index']
  #allocation1 [shape = 'u32[144,128]{1,0:T(1,128)}', space=vmem, size = 0x12000, scoped, tag = 'internal scratch']
  %s0 = inlined_call_operand.hbm [shape: f32[16,160], index: 0, kind: input, shape index: {}]
  %s1 = inlined_call_operand.hbm [shape: f32[16,128], index: 1, kind: output, shape index: {}]
  %s2 = sld [smem:[#allocation0]]
  $region18: #{cropping1d.1} parent=0
    _
  %s4 = ssub.s32 1, %s2
  %s5 = scalar_select 0, %s4, %s2
  $region1: #{cropping1d.1} parent=0
    #allocation2 [shape = 'u8[8192]{0}', space=vmem, size = 0x2000, scoped, tag = 'input window, operand 0, single buffered']
    #allocation3 [shape = 's32[1]{0}', space=sflag, size = 0x4, scoped, tag = 'scoped memory for cropping1d.1']
    #allocation4 [shape = 's32[1]{0}', space=sflag, size = 0x4, scoped, tag = 'scoped memory for cropping1d.1']
    #allocation5 [shape = 'u8[8192]{0}', space=vmem, size = 0x2000, scoped, tag = 'output window, operand 0, single buffered']
    %6 = vsyncpa [#allocation3], 0
    %7 = vsyncpa [#allocation4], 0
    // Predicated region
    $region2: #{cropping1d.1} parent=1 // pred_check
      _
    $region3: #{cropping1d.1} parent=1 // pred_check_branch
      %9 = sbr.rel (0) target = $region5
    $region4: #{cropping1d.1} parent=1 // pred_region
      %s11 = ssub.s32 256, 256
      %12 = vsyncadd [#allocation3], %s11
      %s13 = sshll.u32 [#allocation2], 4
      %s14 = int_to_ptr.vmem [resolvable:$true] %s13
      %19 = dma.hbm_to_vmem [thread:$0]  %s0, 256, %s14, [#allocation3], 256, 128, 8
    $region5: #{cropping1d.1} parent=1 // pred_fallthru
      _
    // Predicated region
    $region6: #{cropping1d.1} parent=1 // pred_check
      _
    $region7: #{cropping1d.1} parent=1 // pred_check_branch
      %21 = sbr.rel (0) target = $region9
    $region8: #{cropping1d.1} parent=1 // pred_region
      %22 = dma.done [#allocation3], 256
    $region9: #{cropping1d.1} parent=1 // pred_fallthru
      _
    %v23 = vld [vmem:[#allocation2] sm:$0xff]
    %v24 = vld [vmem:[#allocation2 + $0x8] sm:$0xff]
    %25 = vst [vmem:[#allocation5] sm:$0xff] %v23
    %26 = vst [vmem:[#allocation5 + $0x8] sm:$0xff] %v24
    // Predicated region
    $region10: #{cropping1d.1} parent=1 // pred_check
      _
    $region11: #{cropping1d.1} parent=1 // pred_check_branch
      %28 = sbr.rel (0) target = $region13
    $region12: #{cropping1d.1} parent=1 // pred_region
      %s30 = ssub.s32 256, 256
      %31 = vsyncadd [#allocation4], %s30
      %s32 = sshll.u32 [#allocation5], 4
      %s33 = int_to_ptr.vmem [resolvable:$true] %s32
      %38 = dma.vmem_to_hbm [thread:$0]  %s33, 256, %s1, [#allocation4], 128, 128, 8
    $region13: #{cropping1d.1} parent=1 // pred_fallthru
      _
    // Predicated region
    $region14: #{cropping1d.1} parent=1 // pred_check
      _
    $region15: #{cropping1d.1} parent=1 // pred_check_branch
      %40 = sbr.rel (0) target = $region17
    $region16: #{cropping1d.1} parent=1 // pred_region
      %41 = dma.done [#allocation4], 256
    $region17: #{cropping1d.1} parent=1 // pred_fallthru
      _
    %42 = vsyncpa [#allocation3], 1
    %43 = vsyncpa [#allocation4], 1

</llo_original>
